<compile_context>
chip_gen: v6e
topology: v6e:2x2x1
jax: 0.10.0
libtpu: 0.0.40
codegen_flags: <defaults>
</compile_context>

<pallas_src>
import functools

import jax
import jax.numpy as jnp
from jax.experimental import pallas as pl
from jax.experimental.pallas import tpu as pltpu


def _head_kernel(x_ref, wd_ref, bd_ref, wo_ref, bo_ref, out_ref, acc_ref, *,
                 inv_s):
    # x_ref : (TB, TS, H)   wd_ref: (H, H)   bd_ref: (1, H)
    # wo_ref: (H, L)        bo_ref: (1, L)   out_ref: (TB, L)
    # acc_ref: (TB, H) f32 scratch, persistent across the S (reduction) axis.
    s = pl.program_id(1)

    @pl.when(s == 0)
    def _init():
        acc_ref[...] = jnp.zeros_like(acc_ref)

    # Accumulate partial sequence sums in f32 (no blanket cast of the tile;
    # the reduction itself promotes to the f32 accumulator).
    acc_ref[...] += jnp.sum(x_ref[...], axis=1, dtype=jnp.float32)

    @pl.when(s == pl.num_programs(1) - 1)
    def _finalize():
        pooled = acc_ref[...] * inv_s                              # (TB, H)
        # dense -> tanh (dropout in eval mode is identity).
        h = jnp.dot(pooled, wd_ref[...].astype(jnp.float32),
                    preferred_element_type=jnp.float32)
        h = jnp.tanh(h + bd_ref[...].astype(jnp.float32))
        # out_proj
        out = jnp.dot(h, wo_ref[...].astype(jnp.float32),
                      preferred_element_type=jnp.float32)
        out = out + bo_ref[...].astype(jnp.float32)
        out_ref[...] = out.astype(out_ref.dtype)


def _choose_tile(dim, preferred, align=8):
    """Largest divisor of `dim` that is <= preferred and a multiple of `align`,
    falling back to the full extent (which is always legal for BlockSpec)."""
    if dim <= preferred:
        return dim
    t = (preferred // align) * align
    while t >= align:
        if dim % t == 0:
            return t
        t -= align
    return dim


def t5_encoder_classification_head(hidden_states, dense_w, dense_b,
                                   out_proj_w, out_proj_b, *,
                                   tb_target=8, ts_target=512,
                                   vmem_limit_bytes=48 * 1024 * 1024):
    """hidden_states: (B, S, H).
    dense_w: (H, H) torch-layout (out, in); dense_b: (H,)
    out_proj_w: (L, H) torch-layout (out, in); out_proj_b: (L,)
    Returns logits: (B, L)."""
    B, S, H = hidden_states.shape
    L = out_proj_w.shape[0]

    # Pre-transpose torch (out, in) weights to (in, out) for x @ W on the MXU.
    wd = jnp.transpose(dense_w)            # (H, H)
    wo = jnp.transpose(out_proj_w)         # (H, L)
    bd = dense_b.reshape(1, H)
    bo = out_proj_b.reshape(1, L)

    # Tile sizes: TB is the 2nd-to-last dim of the output block (mult of 8 or
    # full B); TS is the 2nd-to-last dim of the activation block (mult of 8 or
    # full S). H / L stay full-extent (typical hidden sizes are 128-aligned
    # anyway; small demo sizes use the full-extent exception).
    TB = _choose_tile(B, tb_target, 8)
    TS = _choose_tile(S, ts_target, 8)
    grid = (B // TB, S // TS)

    kernel = functools.partial(_head_kernel, inv_s=1.0 / S)

    dsize = jnp.dtype(hidden_states.dtype).itemsize
    wsize = jnp.dtype(wd.dtype).itemsize
    cost = pl.CostEstimate(
        flops=B * S * H + 2 * B * H * H + 2 * B * H * L,
        transcendentals=B * H,
        bytes_accessed=(B * S * H * dsize
                        + (H * H + H * L + H + L) * wsize
                        + B * L * dsize),
    )

    return pl.pallas_call(
        kernel,
        out_shape=jax.ShapeDtypeStruct((B, L), hidden_states.dtype),
        grid_spec=pltpu.PrefetchScalarGridSpec(
            num_scalar_prefetch=0,
            grid=grid,
            in_specs=[
                # Streamed activations: new block every (b, s) step.
                pl.BlockSpec((TB, TS, H), lambda b, s: (b, s, 0)),
                # Weights / biases: constant block index -> loaded once,
                # stay VMEM-resident for the whole grid.
                pl.BlockSpec((H, H), lambda b, s: (0, 0)),
                pl.BlockSpec((1, H), lambda b, s: (0, 0)),
                pl.BlockSpec((H, L), lambda b, s: (0, 0)),
                pl.BlockSpec((1, L), lambda b, s: (0, 0)),
            ],
            # Same output block across the S axis (reduction accumulator).
            out_specs=pl.BlockSpec((TB, L), lambda b, s: (b, 0)),
            scratch_shapes=[pltpu.VMEM((TB, H), jnp.float32)],
        ),
        compiler_params=pltpu.CompilerParams(
            dimension_semantics=("parallel", "arbitrary"),
            vmem_limit_bytes=vmem_limit_bytes,
        ),
        cost_estimate=cost,
    )(hidden_states, wd, bd, wo, bo)


def _reference(hidden_states, dense_w, dense_b, out_proj_w, out_proj_b):
    pooled = jnp.mean(hidden_states.astype(jnp.float32), axis=1)
    h = jnp.tanh(pooled @ dense_w.T.astype(jnp.float32) + dense_b)
    return (h @ out_proj_w.T.astype(jnp.float32) + out_proj_b).astype(
        hidden_states.dtype)


if __name__ == "__main__":
    key = jax.random.PRNGKey(0)

    # --- Small demo shapes consistent with the module: B=2, S=8, H=32, L=4 ---
    B, S, H, L = 2, 8, 32, 4
    k_x, k_wd, k_bd, k_wo, k_bo, k2 = jax.random.split(key, 6)

    hidden_states = jax.random.normal(k_x, (B, S, H), dtype=jnp.float32)
    dense_w = jax.random.normal(k_wd, (H, H), dtype=jnp.float32) * 0.05
    dense_b = jax.random.normal(k_bd, (H,), dtype=jnp.float32) * 0.05
    out_proj_w = jax.random.normal(k_wo, (L, H), dtype=jnp.float32) * 0.05
    out_proj_b = jax.random.normal(k_bo, (L,), dtype=jnp.float32) * 0.05

    logits = t5_encoder_classification_head(
        hidden_states, dense_w, dense_b, out_proj_w, out_proj_b)
    jax.block_until_ready(logits)

    ref = _reference(hidden_states, dense_w, dense_b, out_proj_w, out_proj_b)
    assert logits.shape == (B, L)
    assert jnp.allclose(logits, ref, atol=1e-5, rtol=1e-5)

    # --- Second check: shapes large enough to exercise a multi-step grid
    #     (TB=8, TS=512 -> grid (2, 2)) and the accumulator/finalize path ---
    B2, S2, H2, L2 = 16, 1024, 128, 4
    k_x2, k_wd2, k_bd2, k_wo2, k_bo2 = jax.random.split(k2, 5)

    hs2 = jax.random.normal(k_x2, (B2, S2, H2), dtype=jnp.float32)
    wd2 = jax.random.normal(k_wd2, (H2, H2), dtype=jnp.float32) * 0.02
    bd2 = jax.random.normal(k_bd2, (H2,), dtype=jnp.float32) * 0.02
    wo2 = jax.random.normal(k_wo2, (L2, H2), dtype=jnp.float32) * 0.02
    bo2 = jax.random.normal(k_bo2, (L2,), dtype=jnp.float32) * 0.02

    logits2 = t5_encoder_classification_head(hs2, wd2, bd2, wo2, bo2)
    jax.block_until_ready(logits2)

    ref2 = _reference(hs2, wd2, bd2, wo2, bo2)
    assert logits2.shape == (B2, L2)
    assert jnp.allclose(logits2, ref2, atol=1e-4, rtol=1e-4)

    print("KERNEL_OK")
</pallas_src>

<mosaic_0001>
module attributes {stable_mosaic.version = 11 : i64} {
  func.func @_head_kernel(%arg0: i32, %arg1: i32, %arg2: memref<2x8x32xf32, #tpu.memory_space<vmem>>, %arg3: memref<32x32xf32, #tpu.memory_space<vmem>>, %arg4: memref<1x32xf32, #tpu.memory_space<vmem>>, %arg5: memref<32x4xf32, #tpu.memory_space<vmem>>, %arg6: memref<1x4xf32, #tpu.memory_space<vmem>>, %arg7: memref<2x4xf32, #tpu.memory_space<vmem>>, %arg8: memref<2x32xf32, #tpu.memory_space<vmem>>) attributes {dimension_semantics = [#tpu.dimension_semantics<parallel>, #tpu.dimension_semantics<arbitrary>], iteration_bounds = array<i64: 1, 1>, scalar_prefetch = 0 : i64, scratch_operands = 1 : i64, tpu.core_type = #tpu.core_type<tc>, window_params = [{transform_indices = @transform_0, window_bounds = array<i64: 2, 8, 32>}, {pipeline_mode = #tpu.pipeline_mode<synchronous>, transform_indices = @transform_1, window_bounds = array<i64: 32, 32>}, {pipeline_mode = #tpu.pipeline_mode<synchronous>, transform_indices = @transform_2, window_bounds = array<i64: 1, 32>}, {pipeline_mode = #tpu.pipeline_mode<synchronous>, transform_indices = @transform_3, window_bounds = array<i64: 32, 4>}, {pipeline_mode = #tpu.pipeline_mode<synchronous>, transform_indices = @transform_4, window_bounds = array<i64: 1, 4>}, {transform_indices = @transform_5, window_bounds = array<i64: 2, 4>}]} {
    %c0_i32 = arith.constant 0 : i32
    %0 = arith.cmpi eq, %arg1, %c0_i32 : i32
    %1 = arith.extui %0 : i1 to i32
    %c0_i32_0 = arith.constant 0 : i32
    %2 = arith.cmpi ne, %1, %c0_i32_0 : i32
    scf.if %2 {
      %cst_9 = arith.constant 0.000000e+00 : f32
      %11 = vector.broadcast %cst_9 : f32 to vector<2x32xf32>
      %c0_10 = arith.constant 0 : index
      %c0_11 = arith.constant 0 : index
      %12 = vector.load %arg8[%c0_10, %c0_11] : memref<2x32xf32, #tpu.memory_space<vmem>>, vector<2x32xf32>
      tpu.vector_store %arg8[%c0_10, %c0_11], %11 {strides = array<i32>} : memref<2x32xf32, #tpu.memory_space<vmem>>, vector<2x32xf32>,
    } else {
    }
    %c0 = arith.constant 0 : index
    %c0_1 = arith.constant 0 : index
    %3 = vector.load %arg8[%c0, %c0_1] : memref<2x32xf32, #tpu.memory_space<vmem>>, vector<2x32xf32>
    %c0_2 = arith.constant 0 : index
    %c0_3 = arith.constant 0 : index
    %c0_4 = arith.constant 0 : index
    %4 = vector.load %arg2[%c0_2, %c0_3, %c0_4] : memref<2x8x32xf32, #tpu.memory_space<vmem>>, vector<2x8x32xf32>
    %cst = arith.constant dense<0.000000e+00> : vector<2x32xf32>
    %5 = vector.multi_reduction <add>, %4, %cst [1] : vector<2x8x32xf32> to vector<2x32xf32>
    %6 = arith.addf %3, %5 : vector<2x32xf32>
    %c0_5 = arith.constant 0 : index
    %c0_6 = arith.constant 0 : index
    %7 = vector.load %arg8[%c0_5, %c0_6] : memref<2x32xf32, #tpu.memory_space<vmem>>, vector<2x32xf32>
    tpu.vector_store %arg8[%c0_5, %c0_6], %6 {strides = array<i32>} : memref<2x32xf32, #tpu.memory_space<vmem>>, vector<2x32xf32>,
    %c0_i32_7 = arith.constant 0 : i32
    %8 = arith.cmpi eq, %arg1, %c0_i32_7 : i32
    %9 = arith.extui %8 : i1 to i32
    %c0_i32_8 = arith.constant 0 : i32
    %10 = arith.cmpi ne, %9, %c0_i32_8 : i32
    scf.if %10 {
      %c0_9 = arith.constant 0 : index
      %c0_10 = arith.constant 0 : index
      %11 = vector.load %arg8[%c0_9, %c0_10] : memref<2x32xf32, #tpu.memory_space<vmem>>, vector<2x32xf32>
      %cst_11 = arith.constant 1.250000e-01 : f32
      %12 = vector.broadcast %cst_11 : f32 to vector<2x32xf32>
      %13 = arith.mulf %11, %12 : vector<2x32xf32>
      %c0_12 = arith.constant 0 : index
      %c0_13 = arith.constant 0 : index
      %14 = vector.load %arg3[%c0_12, %c0_13] : memref<32x32xf32, #tpu.memory_space<vmem>>, vector<32x32xf32>
      %cst_14 = arith.constant dense<0.000000e+00> : vector<2x32xf32>
      %15 = tpu.matmul %13, %14, %cst_14 {dimension_numbers = #tpu.dot_dimension_numbers<[1], [0], [0], [1], [0, 0, 1, 1], [], []>} : vector<2x32xf32>, vector<32x32xf32>, vector<2x32xf32> -> vector<2x32xf32>
      %c0_15 = arith.constant 0 : index
      %c0_16 = arith.constant 0 : index
      %16 = vector.load %arg4[%c0_15, %c0_16] : memref<1x32xf32, #tpu.memory_space<vmem>>, vector<1x32xf32>
      %17 = vector.broadcast %16 : vector<1x32xf32> to vector<2x32xf32>
      %18 = arith.addf %15, %17 : vector<2x32xf32>
      %19 = math.tanh %18 : vector<2x32xf32>
      %c0_17 = arith.constant 0 : index
      %c0_18 = arith.constant 0 : index
      %20 = vector.load %arg5[%c0_17, %c0_18] : memref<32x4xf32, #tpu.memory_space<vmem>>, vector<32x4xf32>
      %cst_19 = arith.constant dense<0.000000e+00> : vector<2x4xf32>
      %21 = tpu.matmul %19, %20, %cst_19 {dimension_numbers = #tpu.dot_dimension_numbers<[1], [0], [0], [1], [0, 0, 1, 1], [], []>} : vector<2x32xf32>, vector<32x4xf32>, vector<2x4xf32> -> vector<2x4xf32>
      %c0_20 = arith.constant 0 : index
      %c0_21 = arith.constant 0 : index
      %22 = vector.load %arg6[%c0_20, %c0_21] : memref<1x4xf32, #tpu.memory_space<vmem>>, vector<1x4xf32>
      %23 = vector.broadcast %22 : vector<1x4xf32> to vector<2x4xf32>
      %24 = arith.addf %21, %23 : vector<2x4xf32>
      %c0_22 = arith.constant 0 : index
      %c0_23 = arith.constant 0 : index
      %25 = vector.load %arg7[%c0_22, %c0_23] : memref<2x4xf32, #tpu.memory_space<vmem>>, vector<2x4xf32>
      tpu.vector_store %arg7[%c0_22, %c0_23], %24 {strides = array<i32>} : memref<2x4xf32, #tpu.memory_space<vmem>>, vector<2x4xf32>,
    } else {
    }
    return
  }
  func.func @transform_0(%arg0: i32, %arg1: i32) -> (i32, i32, i32) {
    %c0_i32 = arith.constant 0 : i32
    %c0_i32_0 = arith.constant 0 : i32
    return %arg0, %arg1, %c0_i32 : i32, i32, i32
  }
  func.func @transform_1(%arg0: i32, %arg1: i32) -> (i32, i32) {
    %c0_i32 = arith.constant 0 : i32
    %c0_i32_0 = arith.constant 0 : i32
    %c0_i32_1 = arith.constant 0 : i32
    return %c0_i32, %c0_i32_0 : i32, i32
  }
  func.func @transform_2(%arg0: i32, %arg1: i32) -> (i32, i32) {
    %c0_i32 = arith.constant 0 : i32
    %c0_i32_0 = arith.constant 0 : i32
    %c0_i32_1 = arith.constant 0 : i32
    return %c0_i32, %c0_i32_0 : i32, i32
  }
  func.func @transform_3(%arg0: i32, %arg1: i32) -> (i32, i32) {
    %c0_i32 = arith.constant 0 : i32
    %c0_i32_0 = arith.constant 0 : i32
    %c0_i32_1 = arith.constant 0 : i32
    return %c0_i32, %c0_i32_0 : i32, i32
  }
  func.func @transform_4(%arg0: i32, %arg1: i32) -> (i32, i32) {
    %c0_i32 = arith.constant 0 : i32
    %c0_i32_0 = arith.constant 0 : i32
    %c0_i32_1 = arith.constant 0 : i32
    return %c0_i32, %c0_i32_0 : i32, i32
  }
  func.func @transform_5(%arg0: i32, %arg1: i32) -> (i32, i32) {
    %c0_i32 = arith.constant 0 : i32
    %c0_i32_0 = arith.constant 0 : i32
    return %arg0, %c0_i32 : i32, i32
  }
}

</mosaic_0001>

<llo_original>
// kernel: tpu_custom_call.1
$region0: #{tpu_custom_call.1}
  #allocation0 [shape = 'u32[]', space=smem, size = 0x4, offset = 0x4, fixed_abs, tag = 'smem constant byte address 0x4 - core index']
  #allocation1 [shape = 'u32[144,128]{1,0:T(1,128)}', space=vmem, size = 0x12000, scoped, tag = 'internal scratch']
  #allocation2 [shape = 'f32[2,32]{1,0:T(2,128)}', space=vmem, size = 0x400, scoped, tag = 'scratch operand']
  %s0 = inlined_call_operand.hbm [shape: f32[2,8,32], index: 0, kind: input, shape index: {}]
  %s1 = inlined_call_operand.vmem [shape: f32[32,32], index: 1, kind: input, shape index: {}]
  %s2 = inlined_call_operand.vmem [shape: f32[1,32], index: 2, kind: input, shape index: {}]
  %s3 = inlined_call_operand.vmem [shape: f32[32,4], index: 3, kind: input, shape index: {}]
  %s4 = inlined_call_operand.vmem [shape: f32[1,4], index: 4, kind: input, shape index: {}]
  %s5 = inlined_call_operand.hbm [shape: f32[2,4], index: 5, kind: output, shape index: {}]
  %s6 = sld [smem:[#allocation0]]
  $region42: #{tpu_custom_call.1} parent=0
    _
  %s8 = ssub.s32 1, %s6
  %s9 = scalar_select 0, %s8, %s6
  $region1: #{tpu_custom_call.1} parent=0
    #allocation3 [shape = 'u8[8192]{0}', space=vmem, size = 0x2000, scoped, tag = 'input window, operand 0, single buffered']
    #allocation4 [shape = 's32[1]{0}', space=sflag, size = 0x4, scoped, tag = 'scoped memory for tpu_custom_call.1']
    #allocation5 [shape = 's32[1]{0}', space=sflag, size = 0x4, scoped, tag = 'scoped memory for tpu_custom_call.1']
    #allocation6 [shape = 'u8[1024]{0}', space=vmem, size = 0x400, scoped, tag = 'output window, operand 0, single buffered']
    %10 = vsyncpa [#allocation4], 0
    %11 = vsyncpa [#allocation5], 0
    // Predicated region
    $region2: #{tpu_custom_call.1} parent=1 // pred_check
      _
    $region3: #{tpu_custom_call.1} parent=1 // pred_check_branch
      %13 = sbr.rel (0) target = $region5
    $region4: #{tpu_custom_call.1} parent=1 // pred_region
      %s15 = ssub.s32 256, 256
      %16 = vsyncadd [#allocation4], %s15
      %s17 = sshll.u32 [#allocation3], 4
      %s18 = int_to_ptr.vmem [resolvable:$true] %s17
      %23 = dma.hbm_to_vmem [thread:$0]  %s0, 256, %s18, [#allocation4], 128, 128, 8
    $region5: #{tpu_custom_call.1} parent=1 // pred_fallthru
      _
    // Predicated region
    $region6: #{tpu_custom_call.1} parent=1 // pred_check
      _
    $region7: #{tpu_custom_call.1} parent=1 // pred_check_branch
      %25 = sbr.rel (0) target = $region9
    $region8: #{tpu_custom_call.1} parent=1 // pred_region
      _
    $region9: #{tpu_custom_call.1} parent=1 // pred_fallthru
      _
    // Predicated region
    $region10: #{tpu_custom_call.1} parent=1 // pred_check
      _
    $region11: #{tpu_custom_call.1} parent=1 // pred_check_branch
      %27 = sbr.rel (0) target = $region13
    $region12: #{tpu_custom_call.1} parent=1 // pred_region
      _
    $region13: #{tpu_custom_call.1} parent=1 // pred_fallthru
      _
    // Predicated region
    $region14: #{tpu_custom_call.1} parent=1 // pred_check
      _
    $region15: #{tpu_custom_call.1} parent=1 // pred_check_branch
      %29 = sbr.rel (0) target = $region17
    $region16: #{tpu_custom_call.1} parent=1 // pred_region
      _
    $region17: #{tpu_custom_call.1} parent=1 // pred_fallthru
      _
    // Predicated region
    $region18: #{tpu_custom_call.1} parent=1 // pred_check
      _
    $region19: #{tpu_custom_call.1} parent=1 // pred_check_branch
      %31 = sbr.rel (0) target = $region21
    $region20: #{tpu_custom_call.1} parent=1 // pred_region
      _
    $region21: #{tpu_custom_call.1} parent=1 // pred_fallthru
      _
    // Predicated region
    $region22: #{tpu_custom_call.1} parent=1 // pred_check
      _
    $region23: #{tpu_custom_call.1} parent=1 // pred_check_branch
      %33 = sbr.rel (0) target = $region25
    $region24: #{tpu_custom_call.1} parent=1 // pred_region
      %34 = dma.done [#allocation4], 256
    $region25: #{tpu_custom_call.1} parent=1 // pred_fallthru
      _
    %p35 = scmp.eq.s32.totalorder 0, 0
    // Predicated region
    $region26: #{tpu_custom_call.1} parent=1 // pred_check
      %p36 = pneg %p35
    $region27: #{tpu_custom_call.1} parent=1 // pred_check_branch
      %38 = sbr.rel (%p36) target = $region29
    $region28: #{tpu_custom_call.1} parent=1 // pred_region
      %vm39 = vcmask 254976
      %40 = vst.msk [vmem:[#allocation2] sm:$0x3] %vm39, 0.0
    $region29: #{tpu_custom_call.1} parent=1 // pred_fallthru
      _
    %v41 = vld [vmem:[#allocation2] sm:$0x3]
    %v42 = vld [vmem:[#allocation3] sm:$0xff]
    %v43 = vld [vmem:[#allocation3 + $0x8] sm:$0xff]
    %vm44 = vcmask 261120
    %v45 = vsel %vm44, %v42, 0.0
    %v46 = vrot.slane %v45, 4
    %v47 = vadd.f32 %v45, %v46
    %v48 = vrot.slane %v47, 2
    %v49 = vadd.f32 %v47, %v48
    %v50 = vrot.slane %v49, 1
    %v51 = vadd.f32 %v49, %v50
    %v52 = vsel %vm44, %v43, 0.0
    %v53 = vrot.slane %v52, 4
    %v54 = vadd.f32 %v52, %v53
    %v55 = vrot.slane %v54, 2
    %v56 = vadd.f32 %v54, %v55
    %v57 = vrot.slane %v56, 1
    %v58 = vadd.f32 %v56, %v57
    %vm61 = vcmask 1041409
    %v62 = vsel %vm61, %v58, %v51
    %v64 = vadd.f32 %v41, %v62
    %vm65 = vcmask 254976
    %66 = vst.msk [vmem:[#allocation2] sm:$0x3] %vm65, %v64
    // Predicated region
    $region30: #{tpu_custom_call.1} parent=1 // pred_check
      %p67 = pneg %p35
    $region31: #{tpu_custom_call.1} parent=1 // pred_check_branch
      %69 = sbr.rel (%p67) target = $region33
    $region32: #{tpu_custom_call.1} parent=1 // pred_region
      %v70 = vld [vmem:[#allocation2] sm:$0x3]
      %v71 = vmul.f32 %v70, 0.125
      %v72 = vld [vmem:[%s1] sm:$0xff]
      %v73 = vld [vmem:[%s1 + $0x8] sm:$0xff]
      %v74 = vld [vmem:[%s1 + $0x10] sm:$0xff]
      %v75 = vld [vmem:[%s1 + $0x18] sm:$0xff]
      %v76 = vld [vmem:[%s2] sm:$0x1]
      %v78 = vlaneseq
      %v79 = vshrl.u32 %v78, 7
      %v80 = vsub.s32 0, %v79
      %v81 = vrot.slane %v76, %v80
      %v84 = vsel %vm44, %v71, 0
      %86 = vmatprep.subr.mxu0 0.0
      %87 = vmatpush1.msra.mxu0 0.0
      %88 = vmatprep.subr.mxu0 0.0
      %89 = vmatpush1.msra.mxu0 0.0
      %90 = vmatprep.subr.mxu0 0.0
      %91 = vmatpush1.msra.mxu0 0.0
      %92 = vmatprep.subr.mxu0 0.0
      %93 = vmatpush1.msra.mxu0 0.0
      %94 = vmatprep.subr.mxu0 0.0
      %95 = vmatpush1.msra.mxu0 0.0
      %96 = vmatprep.subr.mxu0 0.0
      %97 = vmatpush1.msra.mxu0 0.0
      %98 = vmatprep.subr.mxu0 0.0
      %99 = vmatpush1.msra.mxu0 0.0
      %100 = vmatprep.subr.mxu0 0.0
      %101 = vmatpush1.msra.mxu0 0.0
      %102 = vmatprep.subr.mxu0 0.0
      %103 = vmatpush1.msra.mxu0 0.0
      %104 = vmatprep.subr.mxu0 0.0
      %105 = vmatpush1.msra.mxu0 0.0
      %106 = vmatprep.subr.mxu0 0.0
      %107 = vmatpush1.msra.mxu0 0.0
      %108 = vmatprep.subr.mxu0 0.0
      %109 = vmatpush1.msra.mxu0 0.0
      %110 = vmatprep.subr.mxu0 0.0
      %111 = vmatpush1.msra.mxu0 %v75
      %112 = vmatprep.subr.mxu0 0.0
      %113 = vmatpush1.msra.mxu0 %v74
      %114 = vmatprep.subr.mxu0 0.0
      %115 = vmatpush1.msra.mxu0 %v73
      %116 = vmatprep.subr.mxu0 0.0
      %117 = vmatpush1.msra.mxu0 %v72
      %118 = vmatprep.subr.mxu0 0.0
      %119 = vmatpush2.msra.mxu0 0.0
      %120 = vmatprep.subr.mxu0 0.0
      %121 = vmatpush2.msra.mxu0 0.0
      %122 = vmatprep.subr.mxu0 0.0
      %123 = vmatpush2.msra.mxu0 0.0
      %124 = vmatprep.subr.mxu0 0.0
      %125 = vmatpush2.msra.mxu0 0.0
      %126 = vmatprep.subr.mxu0 0.0
      %127 = vmatpush2.msra.mxu0 0.0
      %128 = vmatprep.subr.mxu0 0.0
      %129 = vmatpush2.msra.mxu0 0.0
      %130 = vmatprep.subr.mxu0 0.0
      %131 = vmatpush2.msra.mxu0 0.0
      %132 = vmatprep.subr.mxu0 0.0
      %133 = vmatpush2.msra.mxu0 0.0
      %134 = vmatprep.subr.mxu0 0.0
      %135 = vmatpush2.msra.mxu0 0.0
      %136 = vmatprep.subr.mxu0 0.0
      %137 = vmatpush2.msra.mxu0 0.0
      %138 = vmatprep.subr.mxu0 0.0
      %139 = vmatpush2.msra.mxu0 0.0
      %140 = vmatprep.subr.mxu0 0.0
      %141 = vmatpush2.msra.mxu0 0.0
      %142 = vmatprep.subr.mxu0 0.0
      %143 = vmatpush2.msra.mxu0 0.0
      %144 = vmatprep.subr.mxu0 0.0
      %145 = vmatpush2.msra.mxu0 0.0
      %146 = vmatprep.subr.mxu0 0.0
      %147 = vmatpush2.msra.mxu0 0.0
      %148 = vmatprep.subr.mxu0 0.0
      %149 = vmatpush2.msra.mxu0 0.0
      %150 = vmatprep.mubr.f32.mxu0 0.0
      %151 = vmatmul.mubr.f32.gmra.mxu0 %v84
      %v152 = vpop.f32.mrf.mxu0
      %v153 = vadd.f32 %v81, %v152
      %v154 = vpop.f32.mrf.mxu0
      %155 = vdwg.mxu0
      %v156 = vtanh.pop %v153
      %v157 = vld [vmem:[%s3] sm:$0xff]
      %v158 = vld [vmem:[%s3 + $0x8] sm:$0xff]
      %v159 = vld [vmem:[%s3 + $0x10] sm:$0xff]
      %v160 = vld [vmem:[%s3 + $0x18] sm:$0xff]
      %v161 = vld [vmem:[%s4] sm:$0x1]
      %v163 = vlaneseq
      %v164 = vshrl.u32 %v163, 7
      %v165 = vsub.s32 0, %v164
      %v166 = vrot.slane %v161, %v165
      %v169 = vsel %vm44, %v156, 0
      %171 = vmatprep.subr.mxu0 0.0
      %172 = vmatpush1.msra.mxu0 0.0
      %173 = vmatprep.subr.mxu0 0.0
      %174 = vmatpush1.msra.mxu0 0.0
      %175 = vmatprep.subr.mxu0 0.0
      %176 = vmatpush1.msra.mxu0 0.0
      %177 = vmatprep.subr.mxu0 0.0
      %178 = vmatpush1.msra.mxu0 0.0
      %179 = vmatprep.subr.mxu0 0.0
      %180 = vmatpush1.msra.mxu0 0.0
      %181 = vmatprep.subr.mxu0 0.0
      %182 = vmatpush1.msra.mxu0 0.0
      %183 = vmatprep.subr.mxu0 0.0
      %184 = vmatpush1.msra.mxu0 0.0
      %185 = vmatprep.subr.mxu0 0.0
      %186 = vmatpush1.msra.mxu0 0.0
      %187 = vmatprep.subr.mxu0 0.0
      %188 = vmatpush1.msra.mxu0 0.0
      %189 = vmatprep.subr.mxu0 0.0
      %190 = vmatpush1.msra.mxu0 0.0
      %191 = vmatprep.subr.mxu0 0.0
      %192 = vmatpush1.msra.mxu0 0.0
      %193 = vmatprep.subr.mxu0 0.0
      %194 = vmatpush1.msra.mxu0 0.0
      %195 = vmatprep.subr.mxu0 0.0
      %196 = vmatpush1.msra.mxu0 %v160
      %197 = vmatprep.subr.mxu0 0.0
      %198 = vmatpush1.msra.mxu0 %v159
      %199 = vmatprep.subr.mxu0 0.0
      %200 = vmatpush1.msra.mxu0 %v158
      %201 = vmatprep.subr.mxu0 0.0
      %202 = vmatpush1.msra.mxu0 %v157
      %203 = vmatprep.subr.mxu0 0.0
      %204 = vmatpush2.msra.mxu0 0.0
      %205 = vmatprep.subr.mxu0 0.0
      %206 = vmatpush2.msra.mxu0 0.0
      %207 = vmatprep.subr.mxu0 0.0
      %208 = vmatpush2.msra.mxu0 0.0
      %209 = vmatprep.subr.mxu0 0.0
      %210 = vmatpush2.msra.mxu0 0.0
      %211 = vmatprep.subr.mxu0 0.0
      %212 = vmatpush2.msra.mxu0 0.0
      %213 = vmatprep.subr.mxu0 0.0
      %214 = vmatpush2.msra.mxu0 0.0
      %215 = vmatprep.subr.mxu0 0.0
      %216 = vmatpush2.msra.mxu0 0.0
      %217 = vmatprep.subr.mxu0 0.0
      %218 = vmatpush2.msra.mxu0 0.0
      %219 = vmatprep.subr.mxu0 0.0
      %220 = vmatpush2.msra.mxu0 0.0
      %221 = vmatprep.subr.mxu0 0.0
      %222 = vmatpush2.msra.mxu0 0.0
      %223 = vmatprep.subr.mxu0 0.0
      %224 = vmatpush2.msra.mxu0 0.0
      %225 = vmatprep.subr.mxu0 0.0
      %226 = vmatpush2.msra.mxu0 0.0
      %227 = vmatprep.subr.mxu0 0.0
      %228 = vmatpush2.msra.mxu0 0.0
      %229 = vmatprep.subr.mxu0 0.0
      %230 = vmatpush2.msra.mxu0 0.0
      %231 = vmatprep.subr.mxu0 0.0
      %232 = vmatpush2.msra.mxu0 0.0
      %233 = vmatprep.subr.mxu0 0.0
      %234 = vmatpush2.msra.mxu0 0.0
      %235 = vmatprep.mubr.f32.mxu0 0.0
      %236 = vmatmul.mubr.f32.gmra.mxu0 %v169
      %v237 = vpop.f32.mrf.mxu0
      %v238 = vadd.f32 %v166, %v237
      %v239 = vpop.f32.mrf.mxu0
      %240 = vdwg.mxu0
      %vm241 = vcmask 25600
      %242 = vst.msk [vmem:[#allocation6] sm:$0x3] %vm241, %v238
    $region33: #{tpu_custom_call.1} parent=1 // pred_fallthru
      _
    // Predicated region
    $region34: #{tpu_custom_call.1} parent=1 // pred_check
      _
    $region35: #{tpu_custom_call.1} parent=1 // pred_check_branch
      %244 = sbr.rel (0) target = $region37
    $region36: #{tpu_custom_call.1} parent=1 // pred_region
      %s246 = ssub.s32 32, 32
      %247 = vsyncadd [#allocation5], %s246
      %s249 = sshll.u32 [#allocation6], 4
      %s250 = int_to_ptr.vmem [resolvable:$true] %s249
      %252 = dma.vmem_to_hbm [thread:$0]  %s250, 32, %s5, [#allocation5]
    $region37: #{tpu_custom_call.1} parent=1 // pred_fallthru
      _
    // Predicated region
    $region38: #{tpu_custom_call.1} parent=1 // pred_check
      _
    $region39: #{tpu_custom_call.1} parent=1 // pred_check_branch
      %254 = sbr.rel (0) target = $region41
    $region40: #{tpu_custom_call.1} parent=1 // pred_region
      %255 = dma.done [#allocation5], 32
    $region41: #{tpu_custom_call.1} parent=1 // pred_fallthru
      _
    %256 = vsyncpa [#allocation4], 1
    %257 = vsyncpa [#allocation5], 1

</llo_original>
